<compile_context>
chip_gen: v6e
topology: v6e:2x2x1
jax: 0.10.0
libtpu: 0.0.40
codegen_flags: <defaults>
</compile_context>

<pallas_src>
import jax
import jax.numpy as jnp
from jax.experimental import pallas as pl
from jax.experimental.pallas import tpu as pltpu


def _round_up(v, m):
    return ((v + m - 1) // m) * m


def _deriv_relu_kernel(x_ref, o_ref):
    """x_ref tile: (TN, TD)  ->  o_ref tile: (TD, TN) = (x_tile.T > 0)."""
    tn, td = x_ref.shape                 # static block shape (guard on this, not runtime extents)
    mask = x_ref[...] > 0.0              # compare in the input's native dtype (bf16 stays bf16)
    if tn % 16 == 0 and td % 128 == 0:
        # Transpose the mask as packed bf16: half the XLU vreg pushes of an f32
        # transpose (only matters if the XLU slot ever binds, e.g. v7x @ 3.2 TB/s
        # HBM).  0.0 / 1.0 are exact in bf16, so this is bit-identical.
        o_ref[...] = jnp.transpose(mask.astype(jnp.bfloat16), (1, 0)).astype(o_ref.dtype)
    else:
        # Odd (full-extent) tile shapes: transpose directly in the output dtype.
        o_ref[...] = jnp.transpose(mask.astype(o_ref.dtype), (1, 0))


def deriv_relu(x, *, tn=1024, td=512, out_dtype=jnp.float32,
               input_buffer_count=None, split_for_megacore=True):
    """Pallas implementation of DerivReLU: (x.T > 0).astype(out_dtype).

    x : (N, D) array (f32 or bf16 — kept in native dtype, no upcast).
    Returns (D, N) in `out_dtype` (float32 by default to match torch .float();
    bf16/int8 output is an opt-in API change since 0/1 are exact there).

    Perf-review driven tiling:
      * Default input block 1024x512 (tn x td), output block 512x1024 -> ~4 MiB
        moved per grid step (amortizes the ~0.35 us/step overhead) and wide,
        lane-dense unmasked vst runs on the output (tn multiple of 128).
      * Small / unaligned N is PADDED up to a multiple of 128 (D to a multiple
        of 8) in the wrapper and the result sliced back, instead of clamping
        the block to the raw extent -> keeps stores unmasked (the single
        biggest measured lever for mem-bound kernels).  Larger unaligned
        extents use a cdiv grid with partial edge blocks.
      * If both extents fit a single tile (1x1 grid), the larger dimension is
        split in half (128-aligned) so a v7x chip's 2 TensorCores both get
        work under dimension_semantics=("parallel","parallel").
      * Double-buffered working set at the defaults is 8 MiB: inside v5e's
        ~16 MiB default scoped VMEM and v6e/v7x's 32 MiB.  If larger tiles
        push past ~12 MiB, vmem_limit_bytes is raised explicitly (v5e).
      * `input_buffer_count=3` opts into pl.Buffered(3) on the input for long
        grids (hides DMA jitter); sweep 2 vs 3 on real workloads, default 2.
    """
    x = jnp.asarray(x)
    assert x.ndim == 2, "DerivReLU expects a 2-D input (matches torch .t())"
    N, D = x.shape

    # ---- tile sizing + small-shape padding (keep stores lane-dense) -------
    if N <= tn:
        N_w = _round_up(N, 128)   # output lane dim: 128-align instead of clamping raw
        tn = N_w
    else:
        N_w = N                   # interior blocks aligned; edge block partial (writeback-masked only)
    if D <= td:
        D_w = _round_up(D, 8)     # full-extent D block; 8-align the output sublane dim
        td = D_w
    else:
        D_w = D

    grid_d = pl.cdiv(D_w, td)     # i over D (output rows)
    grid_n = pl.cdiv(N_w, tn)     # j over N (output lanes)

    # ---- v7x megacore: never emit a 1x1 grid for non-tiny arrays ----------
    if split_for_megacore and grid_d * grid_n == 1:
        if N_w >= 256:
            tn = _round_up(N_w // 2, 128)      # halves stay 128-aligned
        elif D_w >= 256:
            td = _round_up(D_w // 2, 128)      # block != full extent -> must be 128-aligned
        grid_d = pl.cdiv(D_w, td)
        grid_n = pl.cdiv(N_w, tn)

    # ---- pad the input if we rounded the working extents up ---------------
    if (N_w, D_w) != (N, D):
        x_w = jnp.pad(x, ((0, N_w - N), (0, D_w - D)))   # zeros -> mask 0, sliced off below
    else:
        x_w = x

    # ---- specs / compiler params ------------------------------------------
    in_spec_kwargs = {}
    n_in_bufs = 2
    if input_buffer_count is not None and input_buffer_count != 2:
        in_spec_kwargs["pipeline_mode"] = pl.Buffered(input_buffer_count)
        n_in_bufs = input_buffer_count
    in_spec = pl.BlockSpec((tn, td), lambda i, j: (j, i), **in_spec_kwargs)
    out_spec = pl.BlockSpec((td, tn), lambda i, j: (i, j))

    itemsize_in = x.dtype.itemsize
    itemsize_out = jnp.dtype(out_dtype).itemsize
    work_bytes = tn * td * (n_in_bufs * itemsize_in + 2 * itemsize_out)
    cp_kwargs = dict(dimension_semantics=("parallel", "parallel"))
    if work_bytes > 12 * 1024 * 1024:
        # v5e's default scoped-VMEM limit is ~16 MiB (v6e/v7x: 32 MiB); larger
        # tiles (e.g. 1024x1024 f32) need an explicit limit to compile there.
        cp_kwargs["vmem_limit_bytes"] = min(2 * work_bytes, 64 * 1024 * 1024)
    compiler_params = pltpu.CompilerParams(**cp_kwargs)

    cost = pl.CostEstimate(
        flops=0, transcendentals=0,
        bytes_accessed=N_w * D_w * (itemsize_in + itemsize_out))

    out_w = pl.pallas_call(
        _deriv_relu_kernel,
        out_shape=jax.ShapeDtypeStruct((D_w, N_w), out_dtype),
        grid_spec=pltpu.PrefetchScalarGridSpec(
            num_scalar_prefetch=0,
            grid=(grid_d, grid_n),
            in_specs=[in_spec],
            out_specs=out_spec,
        ),
        compiler_params=compiler_params,
        cost_estimate=cost,
    )(x_w)

    if (N_w, D_w) != (N, D):
        out_w = out_w[:D, :N]
    return out_w


def deriv_relu_ref(x):
    return (x.T > 0.0).astype(jnp.float32)


if __name__ == "__main__":
    key = jax.random.PRNGKey(0)
    k1, k2 = jax.random.split(key)

    # Small 2-D input consistent with the module's x.t() usage.
    N, D = 256, 512
    x = jax.random.normal(k1, (N, D), dtype=jnp.float32)
    ref = deriv_relu_ref(x)

    # 1) Default (perf) path: tiles clamp to 128-aligned extents and the
    #    megacore split yields a (1, 2) grid so both v7x TensorCores get work.
    out = deriv_relu(x)
    jax.block_until_ready(out)
    assert out.shape == (D, N), out.shape
    assert out.dtype == jnp.float32, out.dtype
    assert jnp.array_equal(out, ref), "mismatch vs reference (default tiles)"

    # 2) Unaligned shapes: wrapper pads N 300 -> 384 (keeps lane-dense stores),
    #    the cdiv grid handles the partial D edge block, result is sliced back.
    N2, D2 = 300, 520
    x2 = jax.random.normal(k2, (N2, D2), dtype=jnp.float32)
    out2 = deriv_relu(x2)
    jax.block_until_ready(out2)
    assert out2.shape == (D2, N2), out2.shape
    assert jnp.array_equal(out2, deriv_relu_ref(x2)), "mismatch (unaligned)"

    # 3) Explicit multi-tile path: 2x2 grid of (128, 256) input blocks.
    out3 = deriv_relu(x, tn=128, td=256)
    jax.block_until_ready(out3)
    assert jnp.array_equal(out3, ref), "mismatch vs reference (tiled path)"

    # 4) Opt-in narrow dtypes: bf16 activations in, bf16 mask out (0/1 exact).
    xb = x.astype(jnp.bfloat16)
    out4 = deriv_relu(xb, out_dtype=jnp.bfloat16)
    jax.block_until_ready(out4)
    assert out4.dtype == jnp.bfloat16, out4.dtype
    assert jnp.array_equal(out4.astype(jnp.float32),
                           (xb.T > 0).astype(jnp.float32)), "mismatch (bf16)"

    print("KERNEL_OK")
</pallas_src>

<mosaic_0001>
module attributes {stable_mosaic.version = 11 : i64} {
  func.func @_deriv_relu_kernel(%arg0: i32, %arg1: i32, %arg2: memref<128x512xf32, #tpu.memory_space<vmem>>, %arg3: memref<512x128xf32, #tpu.memory_space<vmem>>) attributes {dimension_semantics = [#tpu.dimension_semantics<parallel>, #tpu.dimension_semantics<parallel>], iteration_bounds = array<i64: 1, 2>, scalar_prefetch = 0 : i64, scratch_operands = 0 : i64, tpu.core_type = #tpu.core_type<tc>, window_params = [{transform_indices = @transform_0, window_bounds = array<i64: 128, 512>}, {transform_indices = @transform_1, window_bounds = array<i64: 512, 128>}]} {
    %c0 = arith.constant 0 : index
    %c0_0 = arith.constant 0 : index
    %0 = vector.load %arg2[%c0, %c0_0] : memref<128x512xf32, #tpu.memory_space<vmem>>, vector<128x512xf32>
    %cst = arith.constant 0.000000e+00 : f32
    %1 = vector.broadcast %cst : f32 to vector<128x512xf32>
    %2 = arith.cmpf ogt, %0, %1 : vector<128x512xf32>
    %3 = arith.extui %2 : vector<128x512xi1> to vector<128x512xi32>
    %4 = arith.sitofp %3 : vector<128x512xi32> to vector<128x512xf32>
    %5 = arith.truncf %4 : vector<128x512xf32> to vector<128x512xbf16>
    %6 = tpu.transpose %5, [1, 0] : vector<128x512xbf16> -> vector<512x128xbf16>
    %7 = arith.extf %6 : vector<512x128xbf16> to vector<512x128xf32>
    %c0_1 = arith.constant 0 : index
    %c0_2 = arith.constant 0 : index
    %8 = vector.load %arg3[%c0_1, %c0_2] : memref<512x128xf32, #tpu.memory_space<vmem>>, vector<512x128xf32>
    tpu.vector_store %arg3[%c0_1, %c0_2], %7 {strides = array<i32>} : memref<512x128xf32, #tpu.memory_space<vmem>>, vector<512x128xf32>,
    return
  }
  func.func @transform_0(%arg0: i32, %arg1: i32) -> (i32, i32) {
    %c0_i32 = arith.constant 0 : i32
    return %arg1, %arg0 : i32, i32
  }
  func.func @transform_1(%arg0: i32, %arg1: i32) -> (i32, i32) {
    %c0_i32 = arith.constant 0 : i32
    return %arg0, %arg1 : i32, i32
  }
}

</mosaic_0001>

<llo_original>
// kernel: tpu_custom_call.1
$region0: #{tpu_custom_call.1}
  #allocation0 [shape = 'u32[]', space=smem, size = 0x4, offset = 0x4, fixed_abs, tag = 'smem constant byte address 0x4 - core index']
  #allocation1 [shape = 'u32[144,128]{1,0:T(1,128)}', space=vmem, size = 0x12000, scoped, tag = 'internal scratch']
  %s0 = inlined_call_operand.hbm [shape: f32[256,512], index: 0, kind: input, shape index: {}]
  %s1 = inlined_call_operand.hbm [shape: f32[512,256], index: 1, kind: output, shape index: {}]
  %s2 = sld [smem:[#allocation0]]
  $region41: #{tpu_custom_call.1} parent=0
    _
  %s4 = ssub.s32 1, %s2
  %s5 = scalar_select 0, %s4, %s2
  $region1: #{tpu_custom_call.1} parent=0
    #allocation2 [shape = 'u8[524288]{0}', space=vmem, size = 0x80000, scoped, tag = 'input window, operand 0']
    #allocation3 [shape = 's32[2]{0}', space=sflag, size = 0x8, scoped, tag = 'scoped memory for tpu_custom_call.1']
    #allocation4 [shape = 's32[2]{0}', space=sflag, size = 0x8, scoped, tag = 'scoped memory for tpu_custom_call.1']
    #allocation5 [shape = 'u8[524288]{0}', space=vmem, size = 0x80000, scoped, tag = 'output window, operand 0']
    %6 = vsyncpa [#allocation3], 0
    %s7 = scalar_lea.sflag [#allocation3], 1
    %8 = vsyncpa %s7, 0
    %9 = vsyncpa [#allocation4], 0
    %s10 = scalar_lea.sflag [#allocation4], 1
    %11 = vsyncpa %s10, 0
    loop: start=0, step=1, limit=4
    $region2: #{tpu_custom_call.1} parent=1 // loop_pre_header
      _
    $region3: #{tpu_custom_call.1} parent=1 // loop_header
      %s13 = sphi 0, %s17
      %p14 = scmp.ge.s32.totalorder %s13, 4
      %s20 = sphi 0, %s32
      %s21 = sphi 0, %s28
      %s22 = sphi 0, %s20
      %s23 = sphi 0, %s21
      %s24 = sphi 0, %s22
      %s25 = sphi 0, %s23
      %s37 = sphi 0, %s39
      %s40 = sphi 0, %s37
      %s41 = sphi 0, %s40
      %s57 = sphi 0, %s41
      %s65 = sphi 0, %s67
      %s68 = sphi 0, %s65
      %s69 = sphi 0, %s68
      %s85 = sphi 0, %s69
    $region4: #{tpu_custom_call.1} parent=1 // loop_header_branch
      %16 = sbr.rel (%p14) target = $region8
    $region5: #{tpu_custom_call.1} parent=1 // loop_body
      %s18 = ssub.s32 %s13, 1
      %s19 = ssub.s32 %s13, 2
      %s26 = sadd.s32 1, %s21
      %p27 = scmp.ge.s32.totalorder %s26, 2
      %s28 = scalar_select %p27, 0, %s26
      %s29 = sadd.s32 1, %s20
      %s30 = scalar_select %p27, %s29, %s20
      %p31 = scmp.ge.s32.totalorder %s30, 1
      %s32 = scalar_select %p31, 0, %s30
      %s33 = ssub.s32 %s21, %s28
      %s34 = ssub.s32 %s20, %s32
      %s35 = sor.u32 %s33, %s34
      %p36 = scmp.eq.s32.totalorder %s35, 0
      %s38 = sadd.s32 %s37, 1
      %s39 = scalar_select %p36, %s37, %s38
      %p42 = pneg %p36
      %p43 = scmp.eq.s32.totalorder %s13, 1
      %p44 = por %p42, %p43
      %p45 = scmp.ne.s32.totalorder %s37, %s40
      %p46 = scmp.eq.s32.totalorder %s13, 0
      %p47 = por %p45, %p46
      %p48 = scmp.ne.s32.totalorder %s37, %s40
      %p49 = scmp.eq.s32.totalorder %s18, 1
      %p50 = por %p48, %p49
      %p51 = scmp.ne.s32.totalorder %s40, %s41
      %p52 = scmp.eq.s32.totalorder %s18, 0
      %p53 = por %p51, %p52
      %p54 = scmp.ne.s32.totalorder %s40, %s41
      %p55 = scmp.eq.s32.totalorder %s19, 1
      %p56 = por %p54, %p55
      %p58 = scmp.ne.s32.totalorder %s41, %s57
      %p59 = scmp.eq.s32.totalorder %s19, 0
      %p60 = por %p58, %p59
      %s61 = ssub.s32 %s20, %s32
      %s62 = ssub.s32 %s21, %s28
      %s63 = sor.u32 %s61, %s62
      %p64 = scmp.eq.s32.totalorder %s63, 0
      %s66 = sadd.s32 %s65, 1
      %s67 = scalar_select %p64, %s65, %s66
      %p70 = pneg %p64
      %p71 = scmp.eq.s32.totalorder %s13, 1
      %p72 = por %p70, %p71
      %p73 = scmp.ne.s32.totalorder %s65, %s68
      %p74 = scmp.eq.s32.totalorder %s13, 0
      %p75 = por %p73, %p74
      %p76 = scmp.ne.s32.totalorder %s65, %s68
      %p77 = scmp.eq.s32.totalorder %s18, 1
      %p78 = por %p76, %p77
      %p79 = scmp.ne.s32.totalorder %s68, %s69
      %p80 = scmp.eq.s32.totalorder %s18, 0
      %p81 = por %p79, %p80
      %p82 = scmp.ne.s32.totalorder %s68, %s69
      %p83 = scmp.eq.s32.totalorder %s19, 1
      %p84 = por %p82, %p83
      %p86 = scmp.ne.s32.totalorder %s69, %s85
      %p87 = scmp.eq.s32.totalorder %s19, 0
      %p88 = por %p86, %p87
      %p89 = scmp.le.s32.totalorder 1, %s13
      %p90 = scmp.lt.s32.totalorder %s13, 3
      %p91 = pnand %p89, %p90
      %p92 = pneg %p91
      // Predicated region
      $region9: #{tpu_custom_call.1} parent=5 // pred_check
        _
      $region10: #{tpu_custom_call.1} parent=5 // pred_check_branch
        %94 = sbr.rel (%p91) target = $region12
      $region11: #{tpu_custom_call.1} parent=5 // pred_region
        %s95 = ssub.s32 %s13, 1
      $region12: #{tpu_custom_call.1} parent=5 // pred_fallthru
        _
      %p96 = scmp.lt.s32.totalorder %s13, 2
      // Predicated region
      $region13: #{tpu_custom_call.1} parent=5 // pred_check
        %p97 = pneg %p96
      $region14: #{tpu_custom_call.1} parent=5 // pred_check_branch
        %99 = sbr.rel (%p97) target = $region16
      $region15: #{tpu_custom_call.1} parent=5 // pred_region
        // Predicated region
        $region17: #{tpu_custom_call.1} parent=15 // pred_check
          %p100 = pneg %p47
        $region18: #{tpu_custom_call.1} parent=15 // pred_check_branch
          %102 = sbr.rel (%p100) target = $region20
        $region19: #{tpu_custom_call.1} parent=15 // pred_region
          %s103 = sand.u32 %s37, 1
          %s104 = scalar_lea.sflag [#allocation3], %s103
          %s105 = sand.u32 %s37, 1
          %s106 = smul.addr %s105, 512
          %s107 = scalar_lea.vmem [#allocation2], %s106
          %s108 = smul.u32 16, %s21
          %s109 = smul.u32 4, %s20
          %s111 = ssub.s32 8192, 8192
          %112 = vsyncadd %s104, %s111
          %s113 = smul.addr %s108, 4
          %s114 = sadd.s32 %s109, %s113
          %s115 = smul.addr %s114, 128
          %s116 = scalar_lea.hbm %s0, %s115
          %s117 = sshll.u32 %s107, 4
          %s118 = int_to_ptr.vmem [resolvable:$true] %s117
          %123 = dma.hbm_to_vmem [thread:$0]  %s116, 8192, %s118, %s104, 512, 512, 32
        $region20: #{tpu_custom_call.1} parent=15 // pred_fallthru
          _
      $region16: #{tpu_custom_call.1} parent=5 // pred_fallthru
        _
      %p124 = scmp.le.s32.totalorder 1, %s13
      %p125 = scmp.lt.s32.totalorder %s13, 3
      %p126 = pnand %p124, %p125
      %p127 = pneg %p126
      // Predicated region
      $region21: #{tpu_custom_call.1} parent=5 // pred_check
        _
      $region22: #{tpu_custom_call.1} parent=5 // pred_check_branch
        %129 = sbr.rel (%p126) target = $region24
      $region23: #{tpu_custom_call.1} parent=5 // pred_region
        %s130 = ssub.s32 %s13, 1
        %s131 = sand.u32 %s40, 1
        %s132 = scalar_lea.sflag [#allocation3], %s131
        %s133 = sand.u32 %s40, 1
        %s134 = smul.addr %s133, 512
        %s135 = scalar_lea.vmem [#allocation2], %s134
        // Predicated region
        $region25: #{tpu_custom_call.1} parent=23 // pred_check
          %p136 = pneg %p53
        $region26: #{tpu_custom_call.1} parent=23 // pred_check_branch
          %138 = sbr.rel (%p136) target = $region28
        $region27: #{tpu_custom_call.1} parent=23 // pred_region
          %139 = dma.done %s132, 8192
        $region28: #{tpu_custom_call.1} parent=23 // pred_fallthru
          _
        %s140 = sand.u32 %s40, 1
        %s141 = scalar_lea.sflag [#allocation3], %s140
        %s142 = sand.u32 %s40, 1
        %s143 = smul.addr %s142, 512
        %s144 = scalar_lea.vmem [#allocation2], %s143
        %p145 = pneg %p53
        %p146 = pneg %p50
        %p147 = pneg %p81
        %p148 = pneg %p78
        %s149 = sand.u32 %s68, 1
        %s150 = scalar_lea.sflag [#allocation4], %s149
        %s151 = sand.u32 %s68, 1
        %s152 = smul.addr %s151, 512
        %s153 = scalar_lea.vmem [#allocation5], %s152
        %s154 = smul.u32 16, %s23
        %s155 = smul.u32 4, %s22
        %s156 = smul.u32 64, %s22
        %v157 = vld [vmem:[%s135] sm:$0xff]
        %v158 = vld [vmem:[%s135 + $0x8] sm:$0xff]
        %v159 = vld [vmem:[%s135 + $0x10] sm:$0xff]
        %v160 = vld [vmem:[%s135 + $0x18] sm:$0xff]
        %v161 = vld [vmem:[%s135 + $0x20] sm:$0xff]
        %v162 = vld [vmem:[%s135 + $0x28] sm:$0xff]
        %v163 = vld [vmem:[%s135 + $0x30] sm:$0xff]
        %v164 = vld [vmem:[%s135 + $0x38] sm:$0xff]
        %v165 = vld [vmem:[%s135 + $0x40] sm:$0xff]
        %v166 = vld [vmem:[%s135 + $0x48] sm:$0xff]
        %v167 = vld [vmem:[%s135 + $0x50] sm:$0xff]
        %v168 = vld [vmem:[%s135 + $0x58] sm:$0xff]
        %v169 = vld [vmem:[%s135 + $0x60] sm:$0xff]
        %v170 = vld [vmem:[%s135 + $0x68] sm:$0xff]
        %v171 = vld [vmem:[%s135 + $0x70] sm:$0xff]
        %v172 = vld [vmem:[%s135 + $0x78] sm:$0xff]
        %v173 = vld [vmem:[%s135 + $0x80] sm:$0xff]
        %v174 = vld [vmem:[%s135 + $0x88] sm:$0xff]
        %v175 = vld [vmem:[%s135 + $0x90] sm:$0xff]
        %v176 = vld [vmem:[%s135 + $0x98] sm:$0xff]
        %v177 = vld [vmem:[%s135 + $0xa0] sm:$0xff]
        %v178 = vld [vmem:[%s135 + $0xa8] sm:$0xff]
        %v179 = vld [vmem:[%s135 + $0xb0] sm:$0xff]
        %v180 = vld [vmem:[%s135 + $0xb8] sm:$0xff]
        %v181 = vld [vmem:[%s135 + $0xc0] sm:$0xff]
        %v182 = vld [vmem:[%s135 + $0xc8] sm:$0xff]
        %v183 = vld [vmem:[%s135 + $0xd0] sm:$0xff]
        %v184 = vld [vmem:[%s135 + $0xd8] sm:$0xff]
        %v185 = vld [vmem:[%s135 + $0xe0] sm:$0xff]
        %v186 = vld [vmem:[%s135 + $0xe8] sm:$0xff]
        %v187 = vld [vmem:[%s135 + $0xf0] sm:$0xff]
        %v188 = vld [vmem:[%s135 + $0xf8] sm:$0xff]
        %v189 = vld [vmem:[%s135 + $0x100] sm:$0xff]
        %v190 = vld [vmem:[%s135 + $0x108] sm:$0xff]
        %v191 = vld [vmem:[%s135 + $0x110] sm:$0xff]
        %v192 = vld [vmem:[%s135 + $0x118] sm:$0xff]
        %v193 = vld [vmem:[%s135 + $0x120] sm:$0xff]
        %v194 = vld [vmem:[%s135 + $0x128] sm:$0xff]
        %v195 = vld [vmem:[%s135 + $0x130] sm:$0xff]
        %v196 = vld [vmem:[%s135 + $0x138] sm:$0xff]
        %v197 = vld [vmem:[%s135 + $0x140] sm:$0xff]
        %v198 = vld [vmem:[%s135 + $0x148] sm:$0xff]
        %v199 = vld [vmem:[%s135 + $0x150] sm:$0xff]
        %v200 = vld [vmem:[%s135 + $0x158] sm:$0xff]
        %v201 = vld [vmem:[%s135 + $0x160] sm:$0xff]
        %v202 = vld [vmem:[%s135 + $0x168] sm:$0xff]
        %v203 = vld [vmem:[%s135 + $0x170] sm:$0xff]
        %v204 = vld [vmem:[%s135 + $0x178] sm:$0xff]
        %v205 = vld [vmem:[%s135 + $0x180] sm:$0xff]
        %v206 = vld [vmem:[%s135 + $0x188] sm:$0xff]
        %v207 = vld [vmem:[%s135 + $0x190] sm:$0xff]
        %v208 = vld [vmem:[%s135 + $0x198] sm:$0xff]
        %v209 = vld [vmem:[%s135 + $0x1a0] sm:$0xff]
        %v210 = vld [vmem:[%s135 + $0x1a8] sm:$0xff]
        %v211 = vld [vmem:[%s135 + $0x1b0] sm:$0xff]
        %v212 = vld [vmem:[%s135 + $0x1b8] sm:$0xff]
        %v213 = vld [vmem:[%s135 + $0x1c0] sm:$0xff]
        %v214 = vld [vmem:[%s135 + $0x1c8] sm:$0xff]
        %v215 = vld [vmem:[%s135 + $0x1d0] sm:$0xff]
        %v216 = vld [vmem:[%s135 + $0x1d8] sm:$0xff]
        %v217 = vld [vmem:[%s135 + $0x1e0] sm:$0xff]
        %v218 = vld [vmem:[%s135 + $0x1e8] sm:$0xff]
        %v219 = vld [vmem:[%s135 + $0x1f0] sm:$0xff]
        %v220 = vld [vmem:[%s135 + $0x1f8] sm:$0xff]
        %vm221 = vcmp.gt.f32.partialorder %v157, 0.0
        %vm222 = vcmp.gt.f32.partialorder %v158, 0.0
        %vm223 = vcmp.gt.f32.partialorder %v159, 0.0
        %vm224 = vcmp.gt.f32.partialorder %v160, 0.0
        %vm225 = vcmp.gt.f32.partialorder %v161, 0.0
        %vm226 = vcmp.gt.f32.partialorder %v162, 0.0
        %vm227 = vcmp.gt.f32.partialorder %v163, 0.0
        %vm228 = vcmp.gt.f32.partialorder %v164, 0.0
        %vm229 = vcmp.gt.f32.partialorder %v165, 0.0
        %vm230 = vcmp.gt.f32.partialorder %v166, 0.0
        %vm231 = vcmp.gt.f32.partialorder %v167, 0.0
        %vm232 = vcmp.gt.f32.partialorder %v168, 0.0
        %vm233 = vcmp.gt.f32.partialorder %v169, 0.0
        %vm234 = vcmp.gt.f32.partialorder %v170, 0.0
        %vm235 = vcmp.gt.f32.partialorder %v171, 0.0
        %vm236 = vcmp.gt.f32.partialorder %v172, 0.0
        %vm237 = vcmp.gt.f32.partialorder %v173, 0.0
        %vm238 = vcmp.gt.f32.partialorder %v174, 0.0
        %vm239 = vcmp.gt.f32.partialorder %v175, 0.0
        %vm240 = vcmp.gt.f32.partialorder %v176, 0.0
        %vm241 = vcmp.gt.f32.partialorder %v177, 0.0
        %vm242 = vcmp.gt.f32.partialorder %v178, 0.0
        %vm243 = vcmp.gt.f32.partialorder %v179, 0.0
        %vm244 = vcmp.gt.f32.partialorder %v180, 0.0
        %vm245 = vcmp.gt.f32.partialorder %v181, 0.0
        %vm246 = vcmp.gt.f32.partialorder %v182, 0.0
        %vm247 = vcmp.gt.f32.partialorder %v183, 0.0
        %vm248 = vcmp.gt.f32.partialorder %v184, 0.0
        %vm249 = vcmp.gt.f32.partialorder %v185, 0.0
        %vm250 = vcmp.gt.f32.partialorder %v186, 0.0
        %vm251 = vcmp.gt.f32.partialorder %v187, 0.0
        %vm252 = vcmp.gt.f32.partialorder %v188, 0.0
        %vm253 = vcmp.gt.f32.partialorder %v189, 0.0
        %vm254 = vcmp.gt.f32.partialorder %v190, 0.0
        %vm255 = vcmp.gt.f32.partialorder %v191, 0.0
        %vm256 = vcmp.gt.f32.partialorder %v192, 0.0
        %vm257 = vcmp.gt.f32.partialorder %v193, 0.0
        %vm258 = vcmp.gt.f32.partialorder %v194, 0.0
        %vm259 = vcmp.gt.f32.partialorder %v195, 0.0
        %vm260 = vcmp.gt.f32.partialorder %v196, 0.0
        %vm261 = vcmp.gt.f32.partialorder %v197, 0.0
        %vm262 = vcmp.gt.f32.partialorder %v198, 0.0
        %vm263 = vcmp.gt.f32.partialorder %v199, 0.0
        %vm264 = vcmp.gt.f32.partialorder %v200, 0.0
        %vm265 = vcmp.gt.f32.partialorder %v201, 0.0
        %vm266 = vcmp.gt.f32.partialorder %v202, 0.0
        %vm267 = vcmp.gt.f32.partialorder %v203, 0.0
        %vm268 = vcmp.gt.f32.partialorder %v204, 0.0
        %vm269 = vcmp.gt.f32.partialorder %v205, 0.0
        %vm270 = vcmp.gt.f32.partialorder %v206, 0.0
        %vm271 = vcmp.gt.f32.partialorder %v207, 0.0
        %vm272 = vcmp.gt.f32.partialorder %v208, 0.0
        %vm273 = vcmp.gt.f32.partialorder %v209, 0.0
        %vm274 = vcmp.gt.f32.partialorder %v210, 0.0
        %vm275 = vcmp.gt.f32.partialorder %v211, 0.0
        %vm276 = vcmp.gt.f32.partialorder %v212, 0.0
        %vm277 = vcmp.gt.f32.partialorder %v213, 0.0
        %vm278 = vcmp.gt.f32.partialorder %v214, 0.0
        %vm279 = vcmp.gt.f32.partialorder %v215, 0.0
        %vm280 = vcmp.gt.f32.partialorder %v216, 0.0
        %vm281 = vcmp.gt.f32.partialorder %v217, 0.0
        %vm282 = vcmp.gt.f32.partialorder %v218, 0.0
        %vm283 = vcmp.gt.f32.partialorder %v219, 0.0
        %vm284 = vcmp.gt.f32.partialorder %v220, 0.0
        %v285 = vsel %vm221, 1, 0
        %v286 = vsel %vm222, 1, 0
        %v287 = vsel %vm223, 1, 0
        %v288 = vsel %vm224, 1, 0
        %v289 = vsel %vm225, 1, 0
        %v290 = vsel %vm226, 1, 0
        %v291 = vsel %vm227, 1, 0
        %v292 = vsel %vm228, 1, 0
        %v293 = vsel %vm229, 1, 0
        %v294 = vsel %vm230, 1, 0
        %v295 = vsel %vm231, 1, 0
        %v296 = vsel %vm232, 1, 0
        %v297 = vsel %vm233, 1, 0
        %v298 = vsel %vm234, 1, 0
        %v299 = vsel %vm235, 1, 0
        %v300 = vsel %vm236, 1, 0
        %v301 = vsel %vm237, 1, 0
        %v302 = vsel %vm238, 1, 0
        %v303 = vsel %vm239, 1, 0
        %v304 = vsel %vm240, 1, 0
        %v305 = vsel %vm241, 1, 0
        %v306 = vsel %vm242, 1, 0
        %v307 = vsel %vm243, 1, 0
        %v308 = vsel %vm244, 1, 0
        %v309 = vsel %vm245, 1, 0
        %v310 = vsel %vm246, 1, 0
        %v311 = vsel %vm247, 1, 0
        %v312 = vsel %vm248, 1, 0
        %v313 = vsel %vm249, 1, 0
        %v314 = vsel %vm250, 1, 0
        %v315 = vsel %vm251, 1, 0
        %v316 = vsel %vm252, 1, 0
        %v317 = vsel %vm253, 1, 0
        %v318 = vsel %vm254, 1, 0
        %v319 = vsel %vm255, 1, 0
        %v320 = vsel %vm256, 1, 0
        %v321 = vsel %vm257, 1, 0
        %v322 = vsel %vm258, 1, 0
        %v323 = vsel %vm259, 1, 0
        %v324 = vsel %vm260, 1, 0
        %v325 = vsel %vm261, 1, 0
        %v326 = vsel %vm262, 1, 0
        %v327 = vsel %vm263, 1, 0
        %v328 = vsel %vm264, 1, 0
        %v329 = vsel %vm265, 1, 0
        %v330 = vsel %vm266, 1, 0
        %v331 = vsel %vm267, 1, 0
        %v332 = vsel %vm268, 1, 0
        %v333 = vsel %vm269, 1, 0
        %v334 = vsel %vm270, 1, 0
        %v335 = vsel %vm271, 1, 0
        %v336 = vsel %vm272, 1, 0
        %v337 = vsel %vm273, 1, 0
        %v338 = vsel %vm274, 1, 0
        %v339 = vsel %vm275, 1, 0
        %v340 = vsel %vm276, 1, 0
        %v341 = vsel %vm277, 1, 0
        %v342 = vsel %vm278, 1, 0
        %v343 = vsel %vm279, 1, 0
        %v344 = vsel %vm280, 1, 0
        %v345 = vsel %vm281, 1, 0
        %v346 = vsel %vm282, 1, 0
        %v347 = vsel %vm283, 1, 0
        %v348 = vsel %vm284, 1, 0
        %v349 = vcvt.s32.f32 %v285
        %v350 = vcvt.s32.f32 %v286
        %v351 = vcvt.s32.f32 %v287
        %v352 = vcvt.s32.f32 %v288
        %v353 = vcvt.s32.f32 %v289
        %v354 = vcvt.s32.f32 %v290
        %v355 = vcvt.s32.f32 %v291
        %v356 = vcvt.s32.f32 %v292
        %v357 = vcvt.s32.f32 %v293
        %v358 = vcvt.s32.f32 %v294
        %v359 = vcvt.s32.f32 %v295
        %v360 = vcvt.s32.f32 %v296
        %v361 = vcvt.s32.f32 %v297
        %v362 = vcvt.s32.f32 %v298
        %v363 = vcvt.s32.f32 %v299
        %v364 = vcvt.s32.f32 %v300
        %v365 = vcvt.s32.f32 %v301
        %v366 = vcvt.s32.f32 %v302
        %v367 = vcvt.s32.f32 %v303
        %v368 = vcvt.s32.f32 %v304
        %v369 = vcvt.s32.f32 %v305
        %v370 = vcvt.s32.f32 %v306
        %v371 = vcvt.s32.f32 %v307
        %v372 = vcvt.s32.f32 %v308
        %v373 = vcvt.s32.f32 %v309
        %v374 = vcvt.s32.f32 %v310
        %v375 = vcvt.s32.f32 %v311
        %v376 = vcvt.s32.f32 %v312
        %v377 = vcvt.s32.f32 %v313
        %v378 = vcvt.s32.f32 %v314
        %v379 = vcvt.s32.f32 %v315
        %v380 = vcvt.s32.f32 %v316
        %v381 = vcvt.s32.f32 %v317
        %v382 = vcvt.s32.f32 %v318
        %v383 = vcvt.s32.f32 %v319
        %v384 = vcvt.s32.f32 %v320
        %v385 = vcvt.s32.f32 %v321
        %v386 = vcvt.s32.f32 %v322
        %v387 = vcvt.s32.f32 %v323
        %v388 = vcvt.s32.f32 %v324
        %v389 = vcvt.s32.f32 %v325
        %v390 = vcvt.s32.f32 %v326
        %v391 = vcvt.s32.f32 %v327
        %v392 = vcvt.s32.f32 %v328
        %v393 = vcvt.s32.f32 %v329
        %v394 = vcvt.s32.f32 %v330
        %v395 = vcvt.s32.f32 %v331
        %v396 = vcvt.s32.f32 %v332
        %v397 = vcvt.s32.f32 %v333
        %v398 = vcvt.s32.f32 %v334
        %v399 = vcvt.s32.f32 %v335
        %v400 = vcvt.s32.f32 %v336
        %v401 = vcvt.s32.f32 %v337
        %v402 = vcvt.s32.f32 %v338
        %v403 = vcvt.s32.f32 %v339
        %v404 = vcvt.s32.f32 %v340
        %v405 = vcvt.s32.f32 %v341
        %v406 = vcvt.s32.f32 %v342
        %v407 = vcvt.s32.f32 %v343
        %v408 = vcvt.s32.f32 %v344
        %v409 = vcvt.s32.f32 %v345
        %v410 = vcvt.s32.f32 %v346
        %v411 = vcvt.s32.f32 %v347
        %v412 = vcvt.s32.f32 %v348
        %v413 = vpack.c.bf16 %v353, %v349
        %v414 = vpack.c.bf16 %v354, %v350
        %v415 = vpack.c.bf16 %v355, %v351
        %v416 = vpack.c.bf16 %v356, %v352
        %v417 = vpack.c.bf16 %v361, %v357
        %v418 = vpack.c.bf16 %v362, %v358
        %v419 = vpack.c.bf16 %v363, %v359
        %v420 = vpack.c.bf16 %v364, %v360
        %v421 = vpack.c.bf16 %v369, %v365
        %v422 = vpack.c.bf16 %v370, %v366
        %v423 = vpack.c.bf16 %v371, %v367
        %v424 = vpack.c.bf16 %v372, %v368
        %v425 = vpack.c.bf16 %v377, %v373
        %v426 = vpack.c.bf16 %v378, %v374
        %v427 = vpack.c.bf16 %v379, %v375
        %v428 = vpack.c.bf16 %v380, %v376
        %v429 = vpack.c.bf16 %v385, %v381
        %v430 = vpack.c.bf16 %v386, %v382
        %v431 = vpack.c.bf16 %v387, %v383
        %v432 = vpack.c.bf16 %v388, %v384
        %v433 = vpack.c.bf16 %v393, %v389
        %v434 = vpack.c.bf16 %v394, %v390
        %v435 = vpack.c.bf16 %v395, %v391
        %v436 = vpack.c.bf16 %v396, %v392
        %v437 = vpack.c.bf16 %v401, %v397
        %v438 = vpack.c.bf16 %v402, %v398
        %v439 = vpack.c.bf16 %v403, %v399
        %v440 = vpack.c.bf16 %v404, %v400
        %v441 = vpack.c.bf16 %v409, %v405
        %v442 = vpack.c.bf16 %v410, %v406
        %v443 = vpack.c.bf16 %v411, %v407
        %v444 = vpack.c.bf16 %v412, %v408
        %445 = vxpose.xlu0.c.b16.start [1/8] %v413, 128
        %446 = vxpose.xlu0.c.b16.cont [2/8] %v417, 128
        %447 = vxpose.xlu0.c.b16.cont [3/8] %v421, 128
        %448 = vxpose.xlu0.c.b16.cont [4/8] %v425, 128
        %449 = vxpose.xlu0.c.b16.cont [5/8] %v429, 128
        %450 = vxpose.xlu0.c.b16.cont [6/8] %v433, 128
        %451 = vxpose.xlu0.c.b16.cont [7/8] %v437, 128
        %452 = vxpose.xlu0.c.b16.end [8/8] %v441, 128
        %v453 = vpop.trf.xlu0
        %v454 = vpop.trf.xlu0
        %v455 = vpop.trf.xlu0
        %v456 = vpop.trf.xlu0
        %v457 = vpop.trf.xlu0
        %v458 = vpop.trf.xlu0
        %v459 = vpop.trf.xlu0
        %v460 = vpop.trf.xlu0
        %461 = vxpose.xlu0.c.b16.start [1/8] %v414, 128
        %462 = vxpose.xlu0.c.b16.cont [2/8] %v418, 128
        %463 = vxpose.xlu0.c.b16.cont [3/8] %v422, 128
        %464 = vxpose.xlu0.c.b16.cont [4/8] %v426, 128
        %465 = vxpose.xlu0.c.b16.cont [5/8] %v430, 128
        %466 = vxpose.xlu0.c.b16.cont [6/8] %v434, 128
        %467 = vxpose.xlu0.c.b16.cont [7/8] %v438, 128
        %468 = vxpose.xlu0.c.b16.end [8/8] %v442, 128
        %v469 = vpop.trf.xlu0
        %v470 = vpop.trf.xlu0
        %v471 = vpop.trf.xlu0
        %v472 = vpop.trf.xlu0
        %v473 = vpop.trf.xlu0
        %v474 = vpop.trf.xlu0
        %v475 = vpop.trf.xlu0
        %v476 = vpop.trf.xlu0
        %477 = vxpose.xlu0.c.b16.start [1/8] %v415, 128
        %478 = vxpose.xlu0.c.b16.cont [2/8] %v419, 128
        %479 = vxpose.xlu0.c.b16.cont [3/8] %v423, 128
        %480 = vxpose.xlu0.c.b16.cont [4/8] %v427, 128
        %481 = vxpose.xlu0.c.b16.cont [5/8] %v431, 128
        %482 = vxpose.xlu0.c.b16.cont [6/8] %v435, 128
        %483 = vxpose.xlu0.c.b16.cont [7/8] %v439, 128
        %484 = vxpose.xlu0.c.b16.end [8/8] %v443, 128
        %v485 = vpop.trf.xlu0
        %v486 = vpop.trf.xlu0
        %v487 = vpop.trf.xlu0
        %v488 = vpop.trf.xlu0
        %v489 = vpop.trf.xlu0
        %v490 = vpop.trf.xlu0
        %v491 = vpop.trf.xlu0
        %v492 = vpop.trf.xlu0
        %493 = vxpose.xlu0.c.b16.start [1/8] %v416, 128
        %494 = vxpose.xlu0.c.b16.cont [2/8] %v420, 128
        %495 = vxpose.xlu0.c.b16.cont [3/8] %v424, 128
        %496 = vxpose.xlu0.c.b16.cont [4/8] %v428, 128
        %497 = vxpose.xlu0.c.b16.cont [5/8] %v432, 128
        %498 = vxpose.xlu0.c.b16.cont [6/8] %v436, 128
        %499 = vxpose.xlu0.c.b16.cont [7/8] %v440, 128
        %500 = vxpose.xlu0.c.b16.end [8/8] %v444, 128
        %v501 = vpop.trf.xlu0
        %v502 = vpop.trf.xlu0
        %v503 = vpop.trf.xlu0
        %v504 = vpop.trf.xlu0
        %v505 = vpop.trf.xlu0
        %v506 = vpop.trf.xlu0
        %v507 = vpop.trf.xlu0
        %v508 = vpop.trf.xlu0
        %v509 = vunpack.c.l.bf16 %v453
        %v510 = vunpack.c.h.bf16 %v453
        %v511 = vunpack.c.l.bf16 %v454
        %v512 = vunpack.c.h.bf16 %v454
        %v513 = vunpack.c.l.bf16 %v455
        %v514 = vunpack.c.h.bf16 %v455
        %v515 = vunpack.c.l.bf16 %v456
        %v516 = vunpack.c.h.bf16 %v456
        %v517 = vunpack.c.l.bf16 %v457
        %v518 = vunpack.c.h.bf16 %v457
        %v519 = vunpack.c.l.bf16 %v458
        %v520 = vunpack.c.h.bf16 %v458
        %v521 = vunpack.c.l.bf16 %v459
        %v522 = vunpack.c.h.bf16 %v459
        %v523 = vunpack.c.l.bf16 %v460
        %v524 = vunpack.c.h.bf16 %v460
        %v525 = vunpack.c.l.bf16 %v469
        %v526 = vunpack.c.h.bf16 %v469
        %v527 = vunpack.c.l.bf16 %v470
        %v528 = vunpack.c.h.bf16 %v470
        %v529 = vunpack.c.l.bf16 %v471
        %v530 = vunpack.c.h.bf16 %v471
        %v531 = vunpack.c.l.bf16 %v472
        %v532 = vunpack.c.h.bf16 %v472
        %v533 = vunpack.c.l.bf16 %v473
        %v534 = vunpack.c.h.bf16 %v473
        %v535 = vunpack.c.l.bf16 %v474
        %v536 = vunpack.c.h.bf16 %v474
        %v537 = vunpack.c.l.bf16 %v475
        %v538 = vunpack.c.h.bf16 %v475
        %v539 = vunpack.c.l.bf16 %v476
        %v540 = vunpack.c.h.bf16 %v476
        %v541 = vunpack.c.l.bf16 %v485
        %v542 = vunpack.c.h.bf16 %v485
        %v543 = vunpack.c.l.bf16 %v486
        %v544 = vunpack.c.h.bf16 %v486
        %v545 = vunpack.c.l.bf16 %v487
        %v546 = vunpack.c.h.bf16 %v487
        %v547 = vunpack.c.l.bf16 %v488
        %v548 = vunpack.c.h.bf16 %v488
        %v549 = vunpack.c.l.bf16 %v489
        %v550 = vunpack.c.h.bf16 %v489
        %v551 = vunpack.c.l.bf16 %v490
        %v552 = vunpack.c.h.bf16 %v490
        %v553 = vunpack.c.l.bf16 %v491
        %v554 = vunpack.c.h.bf16 %v491
        %v555 = vunpack.c.l.bf16 %v492
        %v556 = vunpack.c.h.bf16 %v492
        %v557 = vunpack.c.l.bf16 %v501
        %v558 = vunpack.c.h.bf16 %v501
        %v559 = vunpack.c.l.bf16 %v502
        %v560 = vunpack.c.h.bf16 %v502
        %v561 = vunpack.c.l.bf16 %v503
        %v562 = vunpack.c.h.bf16 %v503
        %v563 = vunpack.c.l.bf16 %v504
        %v564 = vunpack.c.h.bf16 %v504
        %v565 = vunpack.c.l.bf16 %v505
        %v566 = vunpack.c.h.bf16 %v505
        %v567 = vunpack.c.l.bf16 %v506
        %v568 = vunpack.c.h.bf16 %v506
        %v569 = vunpack.c.l.bf16 %v507
        %v570 = vunpack.c.h.bf16 %v507
        %v571 = vunpack.c.l.bf16 %v508
        %v572 = vunpack.c.h.bf16 %v508
        %573 = vst [vmem:[%s153] sm:$0xff] %v509
        %574 = vst [vmem:[%s153 + $0x8] sm:$0xff] %v510
        %575 = vst [vmem:[%s153 + $0x10] sm:$0xff] %v511
        %576 = vst [vmem:[%s153 + $0x18] sm:$0xff] %v512
        %577 = vst [vmem:[%s153 + $0x20] sm:$0xff] %v513
        %578 = vst [vmem:[%s153 + $0x28] sm:$0xff] %v514
        %579 = vst [vmem:[%s153 + $0x30] sm:$0xff] %v515
        %580 = vst [vmem:[%s153 + $0x38] sm:$0xff] %v516
        %581 = vst [vmem:[%s153 + $0x40] sm:$0xff] %v517
        %582 = vst [vmem:[%s153 + $0x48] sm:$0xff] %v518
        %583 = vst [vmem:[%s153 + $0x50] sm:$0xff] %v519
        %584 = vst [vmem:[%s153 + $0x58] sm:$0xff] %v520
        %585 = vst [vmem:[%s153 + $0x60] sm:$0xff] %v521
        %586 = vst [vmem:[%s153 + $0x68] sm:$0xff] %v522
        %587 = vst [vmem:[%s153 + $0x70] sm:$0xff] %v523
        %588 = vst [vmem:[%s153 + $0x78] sm:$0xff] %v524
        %589 = vst [vmem:[%s153 + $0x80] sm:$0xff] %v525
        %590 = vst [vmem:[%s153 + $0x88] sm:$0xff] %v526
        %591 = vst [vmem:[%s153 + $0x90] sm:$0xff] %v527
        %592 = vst [vmem:[%s153 + $0x98] sm:$0xff] %v528
        %593 = vst [vmem:[%s153 + $0xa0] sm:$0xff] %v529
        %594 = vst [vmem:[%s153 + $0xa8] sm:$0xff] %v530
        %595 = vst [vmem:[%s153 + $0xb0] sm:$0xff] %v531
        %596 = vst [vmem:[%s153 + $0xb8] sm:$0xff] %v532
        %597 = vst [vmem:[%s153 + $0xc0] sm:$0xff] %v533
        %598 = vst [vmem:[%s153 + $0xc8] sm:$0xff] %v534
        %599 = vst [vmem:[%s153 + $0xd0] sm:$0xff] %v535
        %600 = vst [vmem:[%s153 + $0xd8] sm:$0xff] %v536
        %601 = vst [vmem:[%s153 + $0xe0] sm:$0xff] %v537
        %602 = vst [vmem:[%s153 + $0xe8] sm:$0xff] %v538
        %603 = vst [vmem:[%s153 + $0xf0] sm:$0xff] %v539
        %604 = vst [vmem:[%s153 + $0xf8] sm:$0xff] %v540
        %605 = vst [vmem:[%s153 + $0x100] sm:$0xff] %v541
        %606 = vst [vmem:[%s153 + $0x108] sm:$0xff] %v542
        %607 = vst [vmem:[%s153 + $0x110] sm:$0xff] %v543
        %608 = vst [vmem:[%s153 + $0x118] sm:$0xff] %v544
        %609 = vst [vmem:[%s153 + $0x120] sm:$0xff] %v545
        %610 = vst [vmem:[%s153 + $0x128] sm:$0xff] %v546
        %611 = vst [vmem:[%s153 + $0x130] sm:$0xff] %v547
        %612 = vst [vmem:[%s153 + $0x138] sm:$0xff] %v548
        %613 = vst [vmem:[%s153 + $0x140] sm:$0xff] %v549
        %614 = vst [vmem:[%s153 + $0x148] sm:$0xff] %v550
        %615 = vst [vmem:[%s153 + $0x150] sm:$0xff] %v551
        %616 = vst [vmem:[%s153 + $0x158] sm:$0xff] %v552
        %617 = vst [vmem:[%s153 + $0x160] sm:$0xff] %v553
        %618 = vst [vmem:[%s153 + $0x168] sm:$0xff] %v554
        %619 = vst [vmem:[%s153 + $0x170] sm:$0xff] %v555
        %620 = vst [vmem:[%s153 + $0x178] sm:$0xff] %v556
        %621 = vst [vmem:[%s153 + $0x180] sm:$0xff] %v557
        %622 = vst [vmem:[%s153 + $0x188] sm:$0xff] %v558
        %623 = vst [vmem:[%s153 + $0x190] sm:$0xff] %v559
        %624 = vst [vmem:[%s153 + $0x198] sm:$0xff] %v560
        %625 = vst [vmem:[%s153 + $0x1a0] sm:$0xff] %v561
        %626 = vst [vmem:[%s153 + $0x1a8] sm:$0xff] %v562
        %627 = vst [vmem:[%s153 + $0x1b0] sm:$0xff] %v563
        %628 = vst [vmem:[%s153 + $0x1b8] sm:$0xff] %v564
        %629 = vst [vmem:[%s153 + $0x1c0] sm:$0xff] %v565
        %630 = vst [vmem:[%s153 + $0x1c8] sm:$0xff] %v566
        %631 = vst [vmem:[%s153 + $0x1d0] sm:$0xff] %v567
        %632 = vst [vmem:[%s153 + $0x1d8] sm:$0xff] %v568
        %633 = vst [vmem:[%s153 + $0x1e0] sm:$0xff] %v569
        %634 = vst [vmem:[%s153 + $0x1e8] sm:$0xff] %v570
        %635 = vst [vmem:[%s153 + $0x1f0] sm:$0xff] %v571
        %636 = vst [vmem:[%s153 + $0x1f8] sm:$0xff] %v572
        %s637 = sand.u32 %s68, 1
        %s638 = scalar_lea.sflag [#allocation4], %s637
        %s639 = sand.u32 %s68, 1
        %s640 = smul.addr %s639, 512
        %s641 = scalar_lea.vmem [#allocation5], %s640
        // Predicated region
        $region29: #{tpu_custom_call.1} parent=23 // pred_check
          %p642 = pneg %p78
        $region30: #{tpu_custom_call.1} parent=23 // pred_check_branch
          %644 = sbr.rel (%p642) target = $region32
        $region31: #{tpu_custom_call.1} parent=23 // pred_region
          %s645 = smul.u32 64, %s22
          %s647 = ssub.s32 8192, 8192
          %648 = vsyncadd %s638, %s647
          %s649 = smul.addr %s645, 2
          %s650 = sadd.s32 %s23, %s649
          %s651 = smul.addr %s650, 128
          %s652 = scalar_lea.hbm %s1, %s651
          %s653 = sshll.u32 %s641, 4
          %s654 = int_to_ptr.vmem [resolvable:$true] %s653
          %659 = dma.vmem_to_hbm [thread:$0]  %s654, 8192, %s652, %s638, 128, 256, 8
        $region32: #{tpu_custom_call.1} parent=23 // pred_fallthru
          _
      $region24: #{tpu_custom_call.1} parent=5 // pred_fallthru
        _
      %p660 = scmp.le.s32.totalorder 2, %s13
      // Predicated region
      $region33: #{tpu_custom_call.1} parent=5 // pred_check
        %p661 = pneg %p660
      $region34: #{tpu_custom_call.1} parent=5 // pred_check_branch
        %663 = sbr.rel (%p661) target = $region36
      $region35: #{tpu_custom_call.1} parent=5 // pred_region
        %s664 = ssub.s32 %s13, 2
        // Predicated region
        $region37: #{tpu_custom_call.1} parent=35 // pred_check
          %p665 = pneg %p84
        $region38: #{tpu_custom_call.1} parent=35 // pred_check_branch
          %667 = sbr.rel (%p665) target = $region40
        $region39: #{tpu_custom_call.1} parent=35 // pred_region
          %s668 = sand.u32 %s69, 1
          %s669 = scalar_lea.sflag [#allocation4], %s668
          %s670 = sand.u32 %s69, 1
          %s671 = smul.addr %s670, 512
          %s672 = scalar_lea.vmem [#allocation5], %s671
          %673 = dma.done %s669, 8192
        $region40: #{tpu_custom_call.1} parent=35 // pred_fallthru
          _
      $region36: #{tpu_custom_call.1} parent=5 // pred_fallthru
        _
    $region6: #{tpu_custom_call.1} parent=1 // loop_footer
      %s17 = sadd.s32 1, %s13
    $region7: #{tpu_custom_call.1} parent=1 // loop_footer_branch
      %12 = sbr.rel target = $region3
    $region8: #{tpu_custom_call.1} parent=1 // loop_exit
      _
    %674 = vsyncpa [#allocation3], 1
    %s675 = scalar_lea.sflag [#allocation3], 1
    %676 = vsyncpa %s675, 1
    %677 = vsyncpa [#allocation4], 1
    %s678 = scalar_lea.sflag [#allocation4], 1
    %679 = vsyncpa %s678, 1

</llo_original>
